<compile_context>
chip_gen: v5e
topology: v5e:2x2
jax: 0.10.0
libtpu: 0.0.40
codegen_flags: <defaults>
</compile_context>

<pallas_src>
import functools

import jax
import jax.numpy as jnp
from jax.experimental import pallas as pl
from jax.experimental.pallas import tpu as pltpu


def _round_up(v, m):
    return ((v + m - 1) // m) * m


def gin_forward_kernel(x_ref, adj_ref, w1_ref, w2_ref, wl_ref, bias_ref,
                       out_ref, src_scratch, h1_scratch,
                       *, tm, hp, cp, num_classes):
    """Two-phase fused GIN forward over destination-row tiles of the adjacency."""
    phase = pl.program_id(0)
    i = pl.program_id(1)

    b1 = bias_ref[0:1, :hp]           # [1, HP]
    b2 = bias_ref[1:2, :hp]           # [1, HP]
    bl = bias_ref[2:3, :cp]           # [1, CP]

    # One-time projection of the *source* features for the current phase.
    @pl.when(jnp.logical_and(phase == 0, i == 0))
    def _():
        src_scratch[...] = jnp.dot(
            x_ref[...], w1_ref[...],
            preferred_element_type=jnp.float32).astype(jnp.bfloat16)

    @pl.when(jnp.logical_and(phase == 1, i == 0))
    def _():
        # Phase 0 has fully populated h1_scratch (grid is sequential).
        src_scratch[...] = jnp.dot(
            h1_scratch[...], w2_ref[...],
            preferred_element_type=jnp.float32).astype(jnp.bfloat16)

    # O(N^2) aggregation for this destination-row tile: (TM, NP) @ (NP, HP).
    agg = jnp.dot(adj_ref[...], src_scratch[...],
                  preferred_element_type=jnp.float32)

    @pl.when(phase == 0)
    def _():
        # GINConv 1 + ReLU; store h1 rows into the persistent scratch.
        h1 = jnp.maximum(agg + b1, 0.0)
        # F.dropout(x, training=False) is the identity in eval mode.
        # TODO(synk): training-mode dropout (pltpu.prng_seed / prng_random_bits)
        # not implemented.
        row0 = pl.multiple_of(i * tm, tm)
        h1_scratch[pl.ds(row0, tm), :] = h1.astype(jnp.bfloat16)

    @pl.when(phase == 1)
    def _():
        # GINConv 2, classifier and log_softmax for this row tile.
        h2 = agg + b2
        logits = jnp.dot(h2.astype(jnp.bfloat16), wl_ref[...],
                         preferred_element_type=jnp.float32) + bl
        if cp > num_classes:
            col = jax.lax.broadcasted_iota(jnp.int32, logits.shape, 1)
            logits = jnp.where(col < num_classes, logits, -1e30)
        z = logits - jnp.max(logits, axis=-1, keepdims=True)
        lse = jnp.log(jnp.sum(jnp.exp(z), axis=-1, keepdims=True))
        out_ref[...] = (z - lse).astype(out_ref.dtype)


@functools.partial(jax.jit, static_argnames=("eps",))
def gin_convolution_lin(x, edge_index, params, *, eps=0.0):
    """Builds the dense augmented adjacency and runs the fused Pallas kernel."""
    N, num_features = x.shape
    hidden = params["w1"].shape[1]
    num_classes = params["w_lin"].shape[1]

    # Lane-dense padded sizes (zero padding is exact through matmul/bias/relu).
    FINP = _round_up(num_features, 128)
    HP = _round_up(hidden, 128)
    CP = _round_up(num_classes, 128)
    BW = max(HP, CP)

    # Destination-row tile; pad N so tiles divide it evenly.
    TM = 512 if N >= 512 else _round_up(N, 128)
    NP = _round_up(N, TM)
    num_row_tiles = NP // TM

    # adj[dst, src] += 1 per directed edge; (1 + eps) * I folded in at init so the
    # O(N^2) array is built in one scatter pass and shipped as bf16.
    src, dst = edge_index[0], edge_index[1]
    adj = ((1.0 + eps) * jnp.eye(NP, dtype=jnp.float32)).at[dst, src].add(1.0)
    adj = adj.astype(jnp.bfloat16)

    # Zero-padded bf16 operands (ghost rows/cols never reach real outputs).
    xp = jnp.zeros((NP, FINP), jnp.bfloat16).at[:N, :num_features].set(
        x.astype(jnp.bfloat16))
    w1 = jnp.zeros((FINP, HP), jnp.bfloat16).at[:num_features, :hidden].set(
        params["w1"].astype(jnp.bfloat16))
    w2 = jnp.zeros((HP, HP), jnp.bfloat16).at[:hidden, :hidden].set(
        params["w2"].astype(jnp.bfloat16))
    wl = jnp.zeros((HP, CP), jnp.bfloat16).at[:hidden, :num_classes].set(
        params["w_lin"].astype(jnp.bfloat16))

    bias = jnp.zeros((3, BW), jnp.float32)
    bias = bias.at[0, :hidden].set(params["b1"].reshape(-1))
    bias = bias.at[1, :hidden].set(params["b2"].reshape(-1))
    bias = bias.at[2, :num_classes].set(params["b_lin"].reshape(-1))

    kernel = functools.partial(gin_forward_kernel, tm=TM, hp=HP, cp=CP,
                               num_classes=num_classes)

    # VMEM budget from the tile plan (+2x headroom), not a blanket request.
    b16, f32 = 2, 4
    vmem_plan = (2 * TM * NP * b16                              # adj tile (double-buffered)
                 + 2 * NP * FINP * b16                          # x (full array)
                 + 2 * (FINP * HP + HP * HP + HP * CP) * b16    # weights
                 + 2 * 3 * BW * f32                             # packed biases
                 + 2 * TM * CP * f32                            # output tile
                 + 2 * NP * HP * b16)                           # persistent scratches
    vmem_limit = int(2 * vmem_plan + (4 << 20))

    grid_spec = pltpu.PrefetchScalarGridSpec(
        num_scalar_prefetch=0,
        grid=(2, num_row_tiles),
        in_specs=[
            pl.BlockSpec((NP, FINP), lambda p, i: (0, 0)),   # x
            pl.BlockSpec((TM, NP), lambda p, i: (i, 0)),     # adjacency row tile
            pl.BlockSpec((FINP, HP), lambda p, i: (0, 0)),   # W1
            pl.BlockSpec((HP, HP), lambda p, i: (0, 0)),     # W2
            pl.BlockSpec((HP, CP), lambda p, i: (0, 0)),     # W_lin
            pl.BlockSpec((3, BW), lambda p, i: (0, 0)),      # packed biases
        ],
        # i*p keeps the output block pinned to tile 0 during phase 0 (never
        # written), so the only HBM writebacks carry the real phase-1 values.
        out_specs=pl.BlockSpec((TM, CP), lambda p, i: (i * p, 0)),
        scratch_shapes=[
            pltpu.VMEM((NP, HP), jnp.bfloat16),   # projected source features
            pltpu.VMEM((NP, HP), jnp.bfloat16),   # h1 for all nodes
        ],
    )

    out = pl.pallas_call(
        kernel,
        out_shape=jax.ShapeDtypeStruct((NP, CP), jnp.float32),
        grid_spec=grid_spec,
        compiler_params=pltpu.CompilerParams(
            dimension_semantics=("arbitrary", "arbitrary"),
            vmem_limit_bytes=vmem_limit),
    )(xp, adj, w1, w2, wl, bias)

    return out[:N, :num_classes], edge_index


def _glorot(key, shape):
    fan_in, fan_out = shape[0], shape[-1]
    lim = jnp.sqrt(6.0 / (fan_in + fan_out))
    return jax.random.uniform(key, shape, jnp.float32, -lim, lim)


def init_params(key, num_features, hidden_units, num_classes):
    ks = jax.random.split(key, 4)
    return {
        # GINConv 1 (nn = Linear(num_features, hidden))
        "w1":    _glorot(ks[0], (num_features, hidden_units)),
        "b1":    jnp.zeros((1, hidden_units), jnp.float32),
        # GINConv 2 (nn = Linear(hidden, hidden))
        "w2":    _glorot(ks[1], (hidden_units, hidden_units)),
        "b2":    jnp.zeros((1, hidden_units), jnp.float32),
        # final Linear
        "w_lin": _glorot(ks[2], (hidden_units, num_classes)),
        "b_lin": jax.random.uniform(ks[3], (1, num_classes), jnp.float32, -0.1, 0.1),
    }


if __name__ == "__main__":
    N = 128            # number of nodes
    NUM_FEATURES = 16
    HIDDEN = 32
    NUM_CLASSES = 8
    E = 512            # number of directed edges

    key = jax.random.PRNGKey(0)
    kx, ke1, ke2, kp = jax.random.split(key, 4)

    x = jax.random.normal(kx, (N, NUM_FEATURES), jnp.float32)
    src = jax.random.randint(ke1, (E,), 0, N)
    dst = jax.random.randint(ke2, (E,), 0, N)
    edge_index = jnp.stack([src, dst]).astype(jnp.int32)   # [2, E], PyG layout

    params = init_params(kp, NUM_FEATURES, HIDDEN, NUM_CLASSES)

    log_probs, edge_index_out = gin_convolution_lin(x, edge_index, params)
    jax.block_until_ready(log_probs)

    assert log_probs.shape == (N, NUM_CLASSES)
    # rows of log-softmax must exp-sum to 1
    assert jnp.allclose(jnp.sum(jnp.exp(log_probs), axis=-1), 1.0, atol=1e-3)
    assert bool(jnp.all(jnp.isfinite(log_probs)))

    print("KERNEL_OK")
</pallas_src>

<mosaic_0001>
module attributes {stable_mosaic.version = 11 : i64} {
  func.func @gin_forward_kernel(%arg0: i32, %arg1: i32, %arg2: memref<128x128xbf16, #tpu.memory_space<vmem>>, %arg3: memref<128x128xbf16, #tpu.memory_space<vmem>>, %arg4: memref<128x128xbf16, #tpu.memory_space<vmem>>, %arg5: memref<128x128xbf16, #tpu.memory_space<vmem>>, %arg6: memref<128x128xbf16, #tpu.memory_space<vmem>>, %arg7: memref<3x128xf32, #tpu.memory_space<vmem>>, %arg8: memref<128x128xf32, #tpu.memory_space<vmem>>, %arg9: memref<128x128xbf16, #tpu.memory_space<vmem>>, %arg10: memref<128x128xbf16, #tpu.memory_space<vmem>>) attributes {dimension_semantics = [#tpu.dimension_semantics<arbitrary>, #tpu.dimension_semantics<arbitrary>], iteration_bounds = array<i64: 2, 1>, scalar_prefetch = 0 : i64, scratch_operands = 2 : i64, tpu.core_type = #tpu.core_type<tc>, window_params = [{pipeline_mode = #tpu.pipeline_mode<synchronous>, transform_indices = @transform_0, window_bounds = array<i64: 128, 128>}, {transform_indices = @transform_1, window_bounds = array<i64: 128, 128>}, {pipeline_mode = #tpu.pipeline_mode<synchronous>, transform_indices = @transform_2, window_bounds = array<i64: 128, 128>}, {pipeline_mode = #tpu.pipeline_mode<synchronous>, transform_indices = @transform_3, window_bounds = array<i64: 128, 128>}, {pipeline_mode = #tpu.pipeline_mode<synchronous>, transform_indices = @transform_4, window_bounds = array<i64: 128, 128>}, {pipeline_mode = #tpu.pipeline_mode<synchronous>, transform_indices = @transform_5, window_bounds = array<i64: 3, 128>}, {transform_indices = @transform_6, window_bounds = array<i64: 128, 128>}]} {
    %c0 = arith.constant 0 : index
    %c0_0 = arith.constant 0 : index
    %0 = vector.load %arg7[%c0, %c0_0] : memref<3x128xf32, #tpu.memory_space<vmem>>, vector<1x128xf32>
    %c1 = arith.constant 1 : index
    %c0_1 = arith.constant 0 : index
    %1 = vector.load %arg7[%c1, %c0_1] : memref<3x128xf32, #tpu.memory_space<vmem>>, vector<1x128xf32>
    %c2 = arith.constant 2 : index
    %c0_2 = arith.constant 0 : index
    %2 = vector.load %arg7[%c2, %c0_2] : memref<3x128xf32, #tpu.memory_space<vmem>>, vector<1x128xf32>
    %c0_i32 = arith.constant 0 : i32
    %3 = arith.cmpi eq, %arg0, %c0_i32 : i32
    %c0_i32_3 = arith.constant 0 : i32
    %4 = arith.cmpi eq, %arg1, %c0_i32_3 : i32
    %5 = arith.andi %3, %4 : i1
    %6 = arith.extui %5 : i1 to i32
    %c0_i32_4 = arith.constant 0 : i32
    %7 = arith.cmpi ne, %6, %c0_i32_4 : i32
    scf.if %7 {
      %c0_15 = arith.constant 0 : index
      %c0_16 = arith.constant 0 : index
      %22 = vector.load %arg2[%c0_15, %c0_16] : memref<128x128xbf16, #tpu.memory_space<vmem>>, vector<128x128xbf16>
      %c0_17 = arith.constant 0 : index
      %c0_18 = arith.constant 0 : index
      %23 = vector.load %arg4[%c0_17, %c0_18] : memref<128x128xbf16, #tpu.memory_space<vmem>>, vector<128x128xbf16>
      %cst_19 = arith.constant dense<0.000000e+00> : vector<128x128xf32>
      %24 = tpu.matmul %22, %23, %cst_19 {dimension_numbers = #tpu.dot_dimension_numbers<[1], [0], [0], [1], [0, 0, 1, 1], [], []>} : vector<128x128xbf16>, vector<128x128xbf16>, vector<128x128xf32> -> vector<128x128xf32>
      %25 = arith.truncf %24 : vector<128x128xf32> to vector<128x128xbf16>
      %c0_20 = arith.constant 0 : index
      %c0_21 = arith.constant 0 : index
      %26 = vector.load %arg9[%c0_20, %c0_21] : memref<128x128xbf16, #tpu.memory_space<vmem>>, vector<128x128xbf16>
      tpu.vector_store %arg9[%c0_20, %c0_21], %25 {strides = array<i32>} : memref<128x128xbf16, #tpu.memory_space<vmem>>, vector<128x128xbf16>,
    } else {
    }
    %c1_i32 = arith.constant 1 : i32
    %8 = arith.cmpi eq, %arg0, %c1_i32 : i32
    %c0_i32_5 = arith.constant 0 : i32
    %9 = arith.cmpi eq, %arg1, %c0_i32_5 : i32
    %10 = arith.andi %8, %9 : i1
    %11 = arith.extui %10 : i1 to i32
    %c0_i32_6 = arith.constant 0 : i32
    %12 = arith.cmpi ne, %11, %c0_i32_6 : i32
    scf.if %12 {
      %c0_15 = arith.constant 0 : index
      %c0_16 = arith.constant 0 : index
      %22 = vector.load %arg10[%c0_15, %c0_16] : memref<128x128xbf16, #tpu.memory_space<vmem>>, vector<128x128xbf16>
      %c0_17 = arith.constant 0 : index
      %c0_18 = arith.constant 0 : index
      %23 = vector.load %arg5[%c0_17, %c0_18] : memref<128x128xbf16, #tpu.memory_space<vmem>>, vector<128x128xbf16>
      %cst_19 = arith.constant dense<0.000000e+00> : vector<128x128xf32>
      %24 = tpu.matmul %22, %23, %cst_19 {dimension_numbers = #tpu.dot_dimension_numbers<[1], [0], [0], [1], [0, 0, 1, 1], [], []>} : vector<128x128xbf16>, vector<128x128xbf16>, vector<128x128xf32> -> vector<128x128xf32>
      %25 = arith.truncf %24 : vector<128x128xf32> to vector<128x128xbf16>
      %c0_20 = arith.constant 0 : index
      %c0_21 = arith.constant 0 : index
      %26 = vector.load %arg9[%c0_20, %c0_21] : memref<128x128xbf16, #tpu.memory_space<vmem>>, vector<128x128xbf16>
      tpu.vector_store %arg9[%c0_20, %c0_21], %25 {strides = array<i32>} : memref<128x128xbf16, #tpu.memory_space<vmem>>, vector<128x128xbf16>,
    } else {
    }
    %c0_7 = arith.constant 0 : index
    %c0_8 = arith.constant 0 : index
    %13 = vector.load %arg3[%c0_7, %c0_8] : memref<128x128xbf16, #tpu.memory_space<vmem>>, vector<128x128xbf16>
    %c0_9 = arith.constant 0 : index
    %c0_10 = arith.constant 0 : index
    %14 = vector.load %arg9[%c0_9, %c0_10] : memref<128x128xbf16, #tpu.memory_space<vmem>>, vector<128x128xbf16>
    %cst = arith.constant dense<0.000000e+00> : vector<128x128xf32>
    %15 = tpu.matmul %13, %14, %cst {dimension_numbers = #tpu.dot_dimension_numbers<[1], [0], [0], [1], [0, 0, 1, 1], [], []>} : vector<128x128xbf16>, vector<128x128xbf16>, vector<128x128xf32> -> vector<128x128xf32>
    %c0_i32_11 = arith.constant 0 : i32
    %16 = arith.cmpi eq, %arg0, %c0_i32_11 : i32
    %17 = arith.extui %16 : i1 to i32
    %c0_i32_12 = arith.constant 0 : i32
    %18 = arith.cmpi ne, %17, %c0_i32_12 : i32
    scf.if %18 {
      %22 = vector.broadcast %0 : vector<1x128xf32> to vector<128x128xf32>
      %23 = arith.addf %15, %22 : vector<128x128xf32>
      %cst_15 = arith.constant 0.000000e+00 : f32
      %24 = vector.broadcast %cst_15 : f32 to vector<128x128xf32>
      %25 = arith.maximumf %23, %24 : vector<128x128xf32>
      %c128_i32 = arith.constant 128 : i32
      %26 = arith.muli %arg1, %c128_i32 : i32
      %27 = tpu.assume_multiple %26, 128 : i32
      %28 = arith.truncf %25 : vector<128x128xf32> to vector<128x128xbf16>
      %29 = arith.index_cast %27 : i32 to index
      %c0_16 = arith.constant 0 : index
      %30 = vector.load %arg10[%29, %c0_16] : memref<128x128xbf16, #tpu.memory_space<vmem>>, vector<128x128xbf16>
      tpu.vector_store %arg10[%29, %c0_16], %28 {strides = array<i32>} : memref<128x128xbf16, #tpu.memory_space<vmem>>, vector<128x128xbf16>,
    } else {
    }
    %c1_i32_13 = arith.constant 1 : i32
    %19 = arith.cmpi eq, %arg0, %c1_i32_13 : i32
    %20 = arith.extui %19 : i1 to i32
    %c0_i32_14 = arith.constant 0 : i32
    %21 = arith.cmpi ne, %20, %c0_i32_14 : i32
    scf.if %21 {
      %22 = vector.broadcast %1 : vector<1x128xf32> to vector<128x128xf32>
      %23 = arith.addf %15, %22 : vector<128x128xf32>
      %24 = arith.truncf %23 : vector<128x128xf32> to vector<128x128xbf16>
      %c0_15 = arith.constant 0 : index
      %c0_16 = arith.constant 0 : index
      %25 = vector.load %arg6[%c0_15, %c0_16] : memref<128x128xbf16, #tpu.memory_space<vmem>>, vector<128x128xbf16>
      %cst_17 = arith.constant dense<0.000000e+00> : vector<128x128xf32>
      %26 = tpu.matmul %24, %25, %cst_17 {dimension_numbers = #tpu.dot_dimension_numbers<[1], [0], [0], [1], [0, 0, 1, 1], [], []>} : vector<128x128xbf16>, vector<128x128xbf16>, vector<128x128xf32> -> vector<128x128xf32>
      %27 = vector.broadcast %2 : vector<1x128xf32> to vector<128x128xf32>
      %28 = arith.addf %26, %27 : vector<128x128xf32>
      %29 = tpu.iota {dimensions = array<i32: 1>} : vector<128x128xi32>
      %c8_i32 = arith.constant 8 : i32
      %30 = vector.broadcast %c8_i32 : i32 to vector<128x128xi32>
      %31 = arith.cmpi slt, %29, %30 : vector<128x128xi32>
      %cst_18 = arith.constant -1.000000e+30 : f32
      %32 = vector.broadcast %cst_18 : f32 to vector<128x128xf32>
      %33 = arith.select %31, %28, %32 : vector<128x128xi1>, vector<128x128xf32>
      %cst_19 = arith.constant dense<0xFF800000> : vector<128xf32>
      %34 = vector.multi_reduction <maximumf>, %33, %cst_19 [1] : vector<128x128xf32> to vector<128xf32>
      %35 = vector.shape_cast %34 : vector<128xf32> to vector<128x1xf32>
      %36 = vector.broadcast %35 : vector<128x1xf32> to vector<128x128xf32>
      %37 = arith.subf %33, %36 : vector<128x128xf32>
      %38 = math.exp %37 : vector<128x128xf32>
      %cst_20 = arith.constant dense<0.000000e+00> : vector<128xf32>
      %39 = vector.multi_reduction <add>, %38, %cst_20 [1] : vector<128x128xf32> to vector<128xf32>
      %40 = vector.shape_cast %39 : vector<128xf32> to vector<128x1xf32>
      %41 = math.log %40 : vector<128x1xf32>
      %42 = vector.broadcast %41 : vector<128x1xf32> to vector<128x128xf32>
      %43 = arith.subf %37, %42 : vector<128x128xf32>
      %c0_21 = arith.constant 0 : index
      %c0_22 = arith.constant 0 : index
      %44 = vector.load %arg8[%c0_21, %c0_22] : memref<128x128xf32, #tpu.memory_space<vmem>>, vector<128x128xf32>
      tpu.vector_store %arg8[%c0_21, %c0_22], %43 {strides = array<i32>} : memref<128x128xf32, #tpu.memory_space<vmem>>, vector<128x128xf32>,
    } else {
    }
    return
  }
  func.func @transform_0(%arg0: i32, %arg1: i32) -> (i32, i32) {
    %c0_i32 = arith.constant 0 : i32
    %c0_i32_0 = arith.constant 0 : i32
    %c0_i32_1 = arith.constant 0 : i32
    return %c0_i32, %c0_i32_0 : i32, i32
  }
  func.func @transform_1(%arg0: i32, %arg1: i32) -> (i32, i32) {
    %c0_i32 = arith.constant 0 : i32
    %c0_i32_0 = arith.constant 0 : i32
    return %arg1, %c0_i32 : i32, i32
  }
  func.func @transform_2(%arg0: i32, %arg1: i32) -> (i32, i32) {
    %c0_i32 = arith.constant 0 : i32
    %c0_i32_0 = arith.constant 0 : i32
    %c0_i32_1 = arith.constant 0 : i32
    return %c0_i32, %c0_i32_0 : i32, i32
  }
  func.func @transform_3(%arg0: i32, %arg1: i32) -> (i32, i32) {
    %c0_i32 = arith.constant 0 : i32
    %c0_i32_0 = arith.constant 0 : i32
    %c0_i32_1 = arith.constant 0 : i32
    return %c0_i32, %c0_i32_0 : i32, i32
  }
  func.func @transform_4(%arg0: i32, %arg1: i32) -> (i32, i32) {
    %c0_i32 = arith.constant 0 : i32
    %c0_i32_0 = arith.constant 0 : i32
    %c0_i32_1 = arith.constant 0 : i32
    return %c0_i32, %c0_i32_0 : i32, i32
  }
  func.func @transform_5(%arg0: i32, %arg1: i32) -> (i32, i32) {
    %c0_i32 = arith.constant 0 : i32
    %c0_i32_0 = arith.constant 0 : i32
    %c0_i32_1 = arith.constant 0 : i32
    return %c0_i32, %c0_i32_0 : i32, i32
  }
  func.func @transform_6(%arg0: i32, %arg1: i32) -> (i32, i32) {
    %0 = arith.muli %arg1, %arg0 : i32
    %c0_i32 = arith.constant 0 : i32
    %c0_i32_0 = arith.constant 0 : i32
    return %0, %c0_i32 : i32, i32
  }
}

</mosaic_0001>

<llo_original>
// kernel: gin_convolution_lin.1
$region0: #{gin_convolution_lin.1}
  #allocation0 [shape = 'u32[]', space=smem, size = 0x4, offset = 0x4, fixed_abs, tag = 'smem constant byte address 0x4 - core index']
  #allocation1 [shape = 'u32[72,128]{1,0:T(1,128)}', space=vmem, size = 0x9000, scoped, tag = 'internal scratch']
  #allocation2 [shape = 'bf16[128,128]{1,0:T(8,128)(2,1)}', space=vmem, size = 0x8000, scoped, tag = 'scratch operand']
  #allocation3 [shape = 'bf16[128,128]{1,0:T(8,128)(2,1)}', space=vmem, size = 0x8000, scoped, tag = 'scratch operand']
  %s0 = inlined_call_operand.vmem [shape: bf16[128,128], index: 0, kind: input, shape index: {}]
  %s1 = inlined_call_operand.vmem [shape: bf16[128,128], index: 1, kind: input, shape index: {}]
  %s2 = inlined_call_operand.vmem [shape: bf16[128,128], index: 2, kind: input, shape index: {}]
  %s3 = inlined_call_operand.vmem [shape: bf16[128,128], index: 3, kind: input, shape index: {}]
  %s4 = inlined_call_operand.vmem [shape: bf16[128,128], index: 4, kind: input, shape index: {}]
  %s5 = inlined_call_operand.vmem [shape: f32[3,128], index: 5, kind: input, shape index: {}]
  %s6 = inlined_call_operand.vmem [shape: f32[128,128], index: 6, kind: output, shape index: {}]
  %s7 = sld [smem:[#allocation0]]
  $region73: #{gin_convolution_lin.1} parent=0
    _
  %s9 = ssub.s32 1, %s7
  %s10 = scalar_select 0, %s9, %s7
  loop: start=0, step=1, limit=4
  $region2: #{gin_convolution_lin.1} parent=0 // loop_pre_header
    _
  $region3: #{gin_convolution_lin.1} parent=0 // loop_header
    %s12 = sphi 0, %s16
    %p13 = scmp.ge.s32.totalorder %s12, 4
    %s19 = sphi 0, %s31
    %s20 = sphi 0, %s27
    %s21 = sphi 0, %s19
    %s22 = sphi 0, %s20
    %s23 = sphi 0, %s21
    %s24 = sphi 0, %s22
    %s32 = sphi 0, %s32
    %s34 = sphi 0, %s32
    %s35 = sphi 0, %s34
    %s49 = sphi 0, %s35
    %s55 = sphi 0, %s57
    %s58 = sphi 0, %s55
    %s59 = sphi 0, %s58
    %s75 = sphi 0, %s59
    %s79 = sphi 0, %s79
    %s81 = sphi 0, %s79
    %s82 = sphi 0, %s81
    %s96 = sphi 0, %s82
    %s100 = sphi 0, %s100
    %s102 = sphi 0, %s100
    %s103 = sphi 0, %s102
    %s117 = sphi 0, %s103
    %s121 = sphi 0, %s121
    %s123 = sphi 0, %s121
    %s124 = sphi 0, %s123
    %s138 = sphi 0, %s124
    %s142 = sphi 0, %s142
    %s144 = sphi 0, %s142
    %s145 = sphi 0, %s144
    %s159 = sphi 0, %s145
    %s167 = sphi 0, %s169
    %s170 = sphi 0, %s167
    %s171 = sphi 0, %s170
    %s187 = sphi 0, %s171
  $region4: #{gin_convolution_lin.1} parent=0 // loop_header_branch
    %15 = sbr.rel (%p13) target = $region8
  $region5: #{gin_convolution_lin.1} parent=0 // loop_body
    %s17 = ssub.s32 %s12, 1
    %s18 = ssub.s32 %s12, 2
    %s25 = sadd.s32 1, %s20
    %p26 = scmp.ge.s32.totalorder %s25, 1
    %s27 = scalar_select %p26, 0, %s25
    %s28 = sadd.s32 1, %s19
    %s29 = scalar_select %p26, %s28, %s19
    %p30 = scmp.ge.s32.totalorder %s29, 2
    %s31 = scalar_select %p30, 0, %s29
    %s33 = sadd.s32 %s32, 1
    %p36 = scmp.eq.s32.totalorder %s12, 1
    %p37 = scmp.ne.s32.totalorder %s32, %s34
    %p38 = scmp.eq.s32.totalorder %s12, 0
    %p39 = por %p37, %p38
    %p40 = scmp.ne.s32.totalorder %s32, %s34
    %p41 = scmp.eq.s32.totalorder %s17, 1
    %p42 = por %p40, %p41
    %p43 = scmp.ne.s32.totalorder %s34, %s35
    %p44 = scmp.eq.s32.totalorder %s17, 0
    %p45 = por %p43, %p44
    %p46 = scmp.ne.s32.totalorder %s34, %s35
    %p47 = scmp.eq.s32.totalorder %s18, 1
    %p48 = por %p46, %p47
    %p50 = scmp.ne.s32.totalorder %s35, %s49
    %p51 = scmp.eq.s32.totalorder %s18, 0
    %p52 = por %p50, %p51
    %s53 = ssub.s32 %s20, %s27
    %p54 = scmp.eq.s32.totalorder %s53, 0
    %s56 = sadd.s32 %s55, 1
    %s57 = scalar_select %p54, %s55, %s56
    %p60 = pneg %p54
    %p61 = scmp.eq.s32.totalorder %s12, 1
    %p62 = por %p60, %p61
    %p63 = scmp.ne.s32.totalorder %s55, %s58
    %p64 = scmp.eq.s32.totalorder %s12, 0
    %p65 = por %p63, %p64
    %p66 = scmp.ne.s32.totalorder %s55, %s58
    %p67 = scmp.eq.s32.totalorder %s17, 1
    %p68 = por %p66, %p67
    %p69 = scmp.ne.s32.totalorder %s58, %s59
    %p70 = scmp.eq.s32.totalorder %s17, 0
    %p71 = por %p69, %p70
    %p72 = scmp.ne.s32.totalorder %s58, %s59
    %p73 = scmp.eq.s32.totalorder %s18, 1
    %p74 = por %p72, %p73
    %p76 = scmp.ne.s32.totalorder %s59, %s75
    %p77 = scmp.eq.s32.totalorder %s18, 0
    %p78 = por %p76, %p77
    %s80 = sadd.s32 %s79, 1
    %p83 = scmp.eq.s32.totalorder %s12, 1
    %p84 = scmp.ne.s32.totalorder %s79, %s81
    %p85 = scmp.eq.s32.totalorder %s12, 0
    %p86 = por %p84, %p85
    %p87 = scmp.ne.s32.totalorder %s79, %s81
    %p88 = scmp.eq.s32.totalorder %s17, 1
    %p89 = por %p87, %p88
    %p90 = scmp.ne.s32.totalorder %s81, %s82
    %p91 = scmp.eq.s32.totalorder %s17, 0
    %p92 = por %p90, %p91
    %p93 = scmp.ne.s32.totalorder %s81, %s82
    %p94 = scmp.eq.s32.totalorder %s18, 1
    %p95 = por %p93, %p94
    %p97 = scmp.ne.s32.totalorder %s82, %s96
    %p98 = scmp.eq.s32.totalorder %s18, 0
    %p99 = por %p97, %p98
    %s101 = sadd.s32 %s100, 1
    %p104 = scmp.eq.s32.totalorder %s12, 1
    %p105 = scmp.ne.s32.totalorder %s100, %s102
    %p106 = scmp.eq.s32.totalorder %s12, 0
    %p107 = por %p105, %p106
    %p108 = scmp.ne.s32.totalorder %s100, %s102
    %p109 = scmp.eq.s32.totalorder %s17, 1
    %p110 = por %p108, %p109
    %p111 = scmp.ne.s32.totalorder %s102, %s103
    %p112 = scmp.eq.s32.totalorder %s17, 0
    %p113 = por %p111, %p112
    %p114 = scmp.ne.s32.totalorder %s102, %s103
    %p115 = scmp.eq.s32.totalorder %s18, 1
    %p116 = por %p114, %p115
    %p118 = scmp.ne.s32.totalorder %s103, %s117
    %p119 = scmp.eq.s32.totalorder %s18, 0
    %p120 = por %p118, %p119
    %s122 = sadd.s32 %s121, 1
    %p125 = scmp.eq.s32.totalorder %s12, 1
    %p126 = scmp.ne.s32.totalorder %s121, %s123
    %p127 = scmp.eq.s32.totalorder %s12, 0
    %p128 = por %p126, %p127
    %p129 = scmp.ne.s32.totalorder %s121, %s123
    %p130 = scmp.eq.s32.totalorder %s17, 1
    %p131 = por %p129, %p130
    %p132 = scmp.ne.s32.totalorder %s123, %s124
    %p133 = scmp.eq.s32.totalorder %s17, 0
    %p134 = por %p132, %p133
    %p135 = scmp.ne.s32.totalorder %s123, %s124
    %p136 = scmp.eq.s32.totalorder %s18, 1
    %p137 = por %p135, %p136
    %p139 = scmp.ne.s32.totalorder %s124, %s138
    %p140 = scmp.eq.s32.totalorder %s18, 0
    %p141 = por %p139, %p140
    %s143 = sadd.s32 %s142, 1
    %p146 = scmp.eq.s32.totalorder %s12, 1
    %p147 = scmp.ne.s32.totalorder %s142, %s144
    %p148 = scmp.eq.s32.totalorder %s12, 0
    %p149 = por %p147, %p148
    %p150 = scmp.ne.s32.totalorder %s142, %s144
    %p151 = scmp.eq.s32.totalorder %s17, 1
    %p152 = por %p150, %p151
    %p153 = scmp.ne.s32.totalorder %s144, %s145
    %p154 = scmp.eq.s32.totalorder %s17, 0
    %p155 = por %p153, %p154
    %p156 = scmp.ne.s32.totalorder %s144, %s145
    %p157 = scmp.eq.s32.totalorder %s18, 1
    %p158 = por %p156, %p157
    %p160 = scmp.ne.s32.totalorder %s145, %s159
    %p161 = scmp.eq.s32.totalorder %s18, 0
    %p162 = por %p160, %p161
    %s163 = smul.u32 %s20, %s19
    %s164 = smul.u32 %s27, %s31
    %s165 = ssub.s32 %s163, %s164
    %p166 = scmp.eq.s32.totalorder %s165, 0
    %s168 = sadd.s32 %s167, 1
    %s169 = scalar_select %p166, %s167, %s168
    %p172 = pneg %p166
    %p173 = scmp.eq.s32.totalorder %s12, 1
    %p174 = por %p172, %p173
    %p175 = scmp.ne.s32.totalorder %s167, %s170
    %p176 = scmp.eq.s32.totalorder %s12, 0
    %p177 = por %p175, %p176
    %p178 = scmp.ne.s32.totalorder %s167, %s170
    %p179 = scmp.eq.s32.totalorder %s17, 1
    %p180 = por %p178, %p179
    %p181 = scmp.ne.s32.totalorder %s170, %s171
    %p182 = scmp.eq.s32.totalorder %s17, 0
    %p183 = por %p181, %p182
    %p184 = scmp.ne.s32.totalorder %s170, %s171
    %p185 = scmp.eq.s32.totalorder %s18, 1
    %p186 = por %p184, %p185
    %p188 = scmp.ne.s32.totalorder %s171, %s187
    %p189 = scmp.eq.s32.totalorder %s18, 0
    %p190 = por %p188, %p189
    %p191 = scmp.le.s32.totalorder 1, %s12
    %p192 = scmp.lt.s32.totalorder %s12, 3
    %p193 = pnand %p191, %p192
    %p194 = pneg %p193
    // Predicated region
    $region9: #{gin_convolution_lin.1} parent=5 // pred_check
      _
    $region10: #{gin_convolution_lin.1} parent=5 // pred_check_branch
      %196 = sbr.rel (%p193) target = $region12
    $region11: #{gin_convolution_lin.1} parent=5 // pred_region
      %s197 = ssub.s32 %s12, 1
      // Predicated region
      $region13: #{gin_convolution_lin.1} parent=11 // pred_check
        %p198 = pneg %p45
      $region14: #{gin_convolution_lin.1} parent=11 // pred_check_branch
        %200 = sbr.rel (%p198) target = $region16
      $region15: #{gin_convolution_lin.1} parent=11 // pred_region
        _
      $region16: #{gin_convolution_lin.1} parent=11 // pred_fallthru
        _
      // Predicated region
      $region17: #{gin_convolution_lin.1} parent=11 // pred_check
        %p201 = pneg %p71
      $region18: #{gin_convolution_lin.1} parent=11 // pred_check_branch
        %203 = sbr.rel (%p201) target = $region20
      $region19: #{gin_convolution_lin.1} parent=11 // pred_region
        %s204 = smul.u32 16, %s22
        %p205 = scmp.lt.s32.totalorder %s204, 15
        %s206 = scalar_select %p205, %s204, 15
        %s207 = smul.addr %s206, 4
        %s208 = scalar_lea.vmem %s1, %s207
        %s209 = smul.u32 16, %s22
      $region20: #{gin_convolution_lin.1} parent=11 // pred_fallthru
        _
      // Predicated region
      $region21: #{gin_convolution_lin.1} parent=11 // pred_check
        %p210 = pneg %p92
      $region22: #{gin_convolution_lin.1} parent=11 // pred_check_branch
        %212 = sbr.rel (%p210) target = $region24
      $region23: #{gin_convolution_lin.1} parent=11 // pred_region
        _
      $region24: #{gin_convolution_lin.1} parent=11 // pred_fallthru
        _
      // Predicated region
      $region25: #{gin_convolution_lin.1} parent=11 // pred_check
        %p213 = pneg %p113
      $region26: #{gin_convolution_lin.1} parent=11 // pred_check_branch
        %215 = sbr.rel (%p213) target = $region28
      $region27: #{gin_convolution_lin.1} parent=11 // pred_region
        _
      $region28: #{gin_convolution_lin.1} parent=11 // pred_fallthru
        _
      // Predicated region
      $region29: #{gin_convolution_lin.1} parent=11 // pred_check
        %p216 = pneg %p134
      $region30: #{gin_convolution_lin.1} parent=11 // pred_check_branch
        %218 = sbr.rel (%p216) target = $region32
      $region31: #{gin_convolution_lin.1} parent=11 // pred_region
        _
      $region32: #{gin_convolution_lin.1} parent=11 // pred_fallthru
        _
      // Predicated region
      $region33: #{gin_convolution_lin.1} parent=11 // pred_check
        %p219 = pneg %p155
      $region34: #{gin_convolution_lin.1} parent=11 // pred_check_branch
        %221 = sbr.rel (%p219) target = $region36
      $region35: #{gin_convolution_lin.1} parent=11 // pred_region
        _
      $region36: #{gin_convolution_lin.1} parent=11 // pred_fallthru
        _
    $region12: #{gin_convolution_lin.1} parent=5 // pred_fallthru
      _
    %p222 = scmp.lt.s32.totalorder %s12, 2
    // Predicated region
    $region37: #{gin_convolution_lin.1} parent=5 // pred_check
      %p223 = pneg %p222
    $region38: #{gin_convolution_lin.1} parent=5 // pred_check_branch
      %225 = sbr.rel (%p223) target = $region40
    $region39: #{gin_convolution_lin.1} parent=5 // pred_region
      _
    $region40: #{gin_convolution_lin.1} parent=5 // pred_fallthru
      _
    %p226 = scmp.le.s32.totalorder 1, %s12
    %p227 = scmp.lt.s32.totalorder %s12, 3
    %p228 = pnand %p226, %p227
    %p229 = pneg %p228
    // Predicated region
    $region41: #{gin_convolution_lin.1} parent=5 // pred_check
      _
    $region42: #{gin_convolution_lin.1} parent=5 // pred_check_branch
      %231 = sbr.rel (%p228) target = $region44
    $region43: #{gin_convolution_lin.1} parent=5 // pred_region
      %s232 = ssub.s32 %s12, 1
      %p233 = pneg %p45
      %p234 = pneg %p42
      %s235 = smul.u32 16, %s22
      %p236 = scmp.lt.s32.totalorder %s235, 15
      %s237 = scalar_select %p236, %s235, 15
      %s238 = smul.addr %s237, 4
      %s239 = scalar_lea.vmem %s1, %s238
      %p240 = pneg %p71
      %p241 = pneg %p68
      %p242 = pneg %p92
      %p243 = pneg %p89
      %p244 = pneg %p113
      %p245 = pneg %p110
      %p246 = pneg %p134
      %p247 = pneg %p131
      %p248 = pneg %p155
      %p249 = pneg %p152
      %p250 = pneg %p183
      %p251 = pneg %p180
      %s252 = smul.u32 %s22, %s21
      %s253 = smul.u32 16, %s252
      %p254 = scmp.lt.s32.totalorder %s253, 15
      %s255 = scalar_select %p254, %s253, 15
      %s256 = smul.addr %s255, 8
      %s257 = scalar_lea.vmem %s6, %s256
      %s258 = smul.u32 16, %s22
      %p259 = scmp.lt.s32.totalorder %s258, 15
      %s260 = scalar_select %p259, %s258, 15
      %s261 = smul.addr %s260, 4
      %s262 = scalar_lea.vmem %s1, %s261
      %s263 = smul.u32 16, %s22
      %s264 = smul.u32 %s22, %s21
      %s265 = smul.u32 16, %s264
      %p266 = scmp.lt.s32.totalorder %s265, 15
      %s267 = scalar_select %p266, %s265, 15
      %s268 = smul.addr %s267, 8
      %s269 = scalar_lea.vmem %s6, %s268
      %s270 = smul.u32 %s22, %s21
      %s271 = smul.u32 16, %s270
      %v272 = vld [vmem:[%s5] sm:$0x1]
      %v273 = vld [vmem:[%s5 + $0x1] sm:$0x1]
      %v274 = vld [vmem:[%s5 + $0x2] sm:$0x1]
      %p275 = scmp.eq.s32.totalorder %s21, 0
      %p276 = scmp.eq.s32.totalorder %s22, 0
      %p277 = pnand %p275, %p276
      %p278 = pneg %p277
      // Predicated region
      $region45: #{gin_convolution_lin.1} parent=43 // pred_check
        _
      $region46: #{gin_convolution_lin.1} parent=43 // pred_check_branch
        %280 = sbr.rel (%p277) target = $region48
      $region47: #{gin_convolution_lin.1} parent=43 // pred_region
        %v281 = vld [vmem:[%s0] sm:$0xf]
        %v282 = vld [vmem:[%s0 + $0x4] sm:$0xf]
        %v283 = vld [vmem:[%s0 + $0x8] sm:$0xf]
        %v284 = vld [vmem:[%s0 + $0xc] sm:$0xf]
        %v285 = vld [vmem:[%s0 + $0x10] sm:$0xf]
        %v286 = vld [vmem:[%s0 + $0x14] sm:$0xf]
        %v287 = vld [vmem:[%s0 + $0x18] sm:$0xf]
        %v288 = vld [vmem:[%s0 + $0x1c] sm:$0xf]
        %v289 = vld [vmem:[%s0 + $0x20] sm:$0xf]
        %v290 = vld [vmem:[%s0 + $0x24] sm:$0xf]
        %v291 = vld [vmem:[%s0 + $0x28] sm:$0xf]
        %v292 = vld [vmem:[%s0 + $0x2c] sm:$0xf]
        %v293 = vld [vmem:[%s0 + $0x30] sm:$0xf]
        %v294 = vld [vmem:[%s0 + $0x34] sm:$0xf]
        %v295 = vld [vmem:[%s0 + $0x38] sm:$0xf]
        %v296 = vld [vmem:[%s0 + $0x3c] sm:$0xf]
        %v297 = vld [vmem:[%s2] sm:$0xf]
        %v298 = vld [vmem:[%s2 + $0x4] sm:$0xf]
        %v299 = vld [vmem:[%s2 + $0x8] sm:$0xf]
        %v300 = vld [vmem:[%s2 + $0xc] sm:$0xf]
        %v301 = vld [vmem:[%s2 + $0x10] sm:$0xf]
        %v302 = vld [vmem:[%s2 + $0x14] sm:$0xf]
        %v303 = vld [vmem:[%s2 + $0x18] sm:$0xf]
        %v304 = vld [vmem:[%s2 + $0x1c] sm:$0xf]
        %v305 = vld [vmem:[%s2 + $0x20] sm:$0xf]
        %v306 = vld [vmem:[%s2 + $0x24] sm:$0xf]
        %v307 = vld [vmem:[%s2 + $0x28] sm:$0xf]
        %v308 = vld [vmem:[%s2 + $0x2c] sm:$0xf]
        %v309 = vld [vmem:[%s2 + $0x30] sm:$0xf]
        %v310 = vld [vmem:[%s2 + $0x34] sm:$0xf]
        %v311 = vld [vmem:[%s2 + $0x38] sm:$0xf]
        %v312 = vld [vmem:[%s2 + $0x3c] sm:$0xf]
        %v329 = vunpack.c.l.b16 %v281
        %v330 = vunpack.c.l.b16 %v282
        %v331 = vunpack.c.l.b16 %v283
        %v332 = vunpack.c.l.b16 %v284
        %v333 = vunpack.c.l.b16 %v285
        %v334 = vunpack.c.l.b16 %v286
        %v335 = vunpack.c.l.b16 %v287
        %v336 = vunpack.c.l.b16 %v288
        %v337 = vunpack.c.l.b16 %v289
        %v338 = vunpack.c.l.b16 %v290
        %v339 = vunpack.c.l.b16 %v291
        %v340 = vunpack.c.l.b16 %v292
        %v341 = vunpack.c.l.b16 %v293
        %v342 = vunpack.c.l.b16 %v294
        %v343 = vunpack.c.l.b16 %v295
        %v344 = vunpack.c.l.b16 %v296
        %v345 = vpack.c.b16 %v330, %v329
        %v346 = vpack.c.b16 %v332, %v331
        %v347 = vpack.c.b16 %v334, %v333
        %v348 = vpack.c.b16 %v336, %v335
        %v349 = vpack.c.b16 %v338, %v337
        %v350 = vpack.c.b16 %v340, %v339
        %v351 = vpack.c.b16 %v342, %v341
        %v352 = vpack.c.b16 %v344, %v343
        %v377 = vunpack.c.l.b16 %v297
        %v378 = vunpack.c.l.b16 %v298
        %v379 = vunpack.c.l.b16 %v299
        %v380 = vunpack.c.l.b16 %v300
        %v381 = vunpack.c.l.b16 %v301
        %v382 = vunpack.c.l.b16 %v302
        %v383 = vunpack.c.l.b16 %v303
        %v384 = vunpack.c.l.b16 %v304
        %v385 = vunpack.c.l.b16 %v305
        %v386 = vunpack.c.l.b16 %v306
        %v387 = vunpack.c.l.b16 %v307
        %v388 = vunpack.c.l.b16 %v308
        %v389 = vunpack.c.l.b16 %v309
        %v390 = vunpack.c.l.b16 %v310
        %v391 = vunpack.c.l.b16 %v311
        %v392 = vunpack.c.l.b16 %v312
        %v393 = vpack.c.b16 %v378, %v377
        %v394 = vpack.c.b16 %v380, %v379
        %v395 = vpack.c.b16 %v382, %v381
        %v396 = vpack.c.b16 %v384, %v383
        %v397 = vpack.c.b16 %v386, %v385
        %v398 = vpack.c.b16 %v388, %v387
        %v399 = vpack.c.b16 %v390, %v389
        %v400 = vpack.c.b16 %v392, %v391
        %409 = vmatpush.bf16.msra.mxu0 %v400
        %410 = vmatpush.bf16.msra.mxu0 %v399
        %411 = vmatpush.bf16.msra.mxu0 %v398
        %412 = vmatpush.bf16.msra.mxu0 %v397
        %413 = vmatpush.bf16.msra.mxu0 %v396
        %414 = vmatpush.bf16.msra.mxu0 %v395
        %415 = vmatpush.bf16.msra.mxu0 %v394
        %416 = vmatpush.bf16.msra.mxu0 %v393
        %417 = vmatmul.bf16.gmra.mxu0 %v345
        %v418 = vpop.f32.mrf.mxu0
        %v419 = vadd.f32 0.0, %v418
        %v420 = vpop.f32.mrf.mxu0
        %v421 = vadd.f32 0.0, %v420
        %422 = vmatmul.bf16.gmra.mxu0 %v346
        %v423 = vpop.f32.mrf.mxu0
        %v424 = vadd.f32 0.0, %v423
        %v425 = vpop.f32.mrf.mxu0
        %v426 = vadd.f32 0.0, %v425
        %427 = vmatmul.bf16.gmra.mxu0 %v347
        %v428 = vpop.f32.mrf.mxu0
        %v429 = vadd.f32 0.0, %v428
        %v430 = vpop.f32.mrf.mxu0
        %v431 = vadd.f32 0.0, %v430
        %432 = vmatmul.bf16.gmra.mxu0 %v348
        %v433 = vpop.f32.mrf.mxu0
        %v434 = vadd.f32 0.0, %v433
        %v435 = vpop.f32.mrf.mxu0
        %v436 = vadd.f32 0.0, %v435
        %437 = vmatmul.bf16.gmra.mxu0 %v349
        %v438 = vpop.f32.mrf.mxu0
        %v439 = vadd.f32 0.0, %v438
        %v440 = vpop.f32.mrf.mxu0
        %v441 = vadd.f32 0.0, %v440
        %442 = vmatmul.bf16.gmra.mxu0 %v350
        %v443 = vpop.f32.mrf.mxu0
        %v444 = vadd.f32 0.0, %v443
        %v445 = vpop.f32.mrf.mxu0
        %v446 = vadd.f32 0.0, %v445
        %447 = vmatmul.bf16.gmra.mxu0 %v351
        %v448 = vpop.f32.mrf.mxu0
        %v449 = vadd.f32 0.0, %v448
        %v450 = vpop.f32.mrf.mxu0
        %v451 = vadd.f32 0.0, %v450
        %452 = vmatmul.bf16.gmra.mxu0 %v352
        %v453 = vpop.f32.mrf.mxu0
        %v454 = vadd.f32 0.0, %v453
        %v455 = vpop.f32.mrf.mxu0
        %v456 = vadd.f32 0.0, %v455
        %457 = vdwg.mxu0
        %v458 = vpack.c.bf16 %v419, %v419
        %v459 = vpack.c.bf16 %v421, %v421
        %v460 = vpack.c.bf16 %v424, %v424
        %v461 = vpack.c.bf16 %v426, %v426
        %v462 = vpack.c.bf16 %v429, %v429
        %v463 = vpack.c.bf16 %v431, %v431
        %v464 = vpack.c.bf16 %v434, %v434
        %v465 = vpack.c.bf16 %v436, %v436
        %v466 = vpack.c.bf16 %v439, %v439
        %v467 = vpack.c.bf16 %v441, %v441
        %v468 = vpack.c.bf16 %v444, %v444
        %v469 = vpack.c.bf16 %v446, %v446
        %v470 = vpack.c.bf16 %v449, %v449
        %v471 = vpack.c.bf16 %v451, %v451
        %v472 = vpack.c.bf16 %v454, %v454
        %v473 = vpack.c.bf16 %v456, %v456
        %474 = vst [vmem:[#allocation2] sm:$0xf] %v458
        %475 = vst [vmem:[#allocation2 + $0x4] sm:$0xf] %v459
        %476 = vst [vmem:[#allocation2 + $0x8] sm:$0xf] %v460
        %477 = vst [vmem:[#allocation2 + $0xc] sm:$0xf] %v461
        %478 = vst [vmem:[#allocation2 + $0x10] sm:$0xf] %v462
        %479 = vst [vmem:[#allocation2 + $0x14] sm:$0xf] %v463
        %480 = vst [vmem:[#allocation2 + $0x18] sm:$0xf] %v464
        %481 = vst [vmem:[#allocation2 + $0x1c] sm:$0xf] %v465
        %482 = vst [vmem:[#allocation2 + $0x20] sm:$0xf] %v466
        %483 = vst [vmem:[#allocation2 + $0x24] sm:$0xf] %v467
        %484 = vst [vmem:[#allocation2 + $0x28] sm:$0xf] %v468
        %485 = vst [vmem:[#allocation2 + $0x2c] sm:$0xf] %v469
        %486 = vst [vmem:[#allocation2 + $0x30] sm:$0xf] %v470
        %487 = vst [vmem:[#allocation2 + $0x34] sm:$0xf] %v471
        %488 = vst [vmem:[#allocation2 + $0x38] sm:$0xf] %v472
        %489 = vst [vmem:[#allocation2 + $0x3c] sm:$0xf] %v473
      $region48: #{gin_convolution_lin.1} parent=43 // pred_fallthru
        _
      %p490 = scmp.eq.s32.totalorder %s21, 1
      %p491 = pnand %p490, %p276
      %p492 = pneg %p491
      // Predicated region
      $region49: #{gin_convolution_lin.1} parent=43 // pred_check
        _
      $region50: #{gin_convolution_lin.1} parent=43 // pred_check_branch
        %494 = sbr.rel (%p491) target = $region52
      $region51: #{gin_convolution_lin.1} parent=43 // pred_region
        %v495 = vld [vmem:[#allocation3] sm:$0xf]
        %v496 = vld [vmem:[#allocation3 + $0x4] sm:$0xf]
        %v497 = vld [vmem:[#allocation3 + $0x8] sm:$0xf]
        %v498 = vld [vmem:[#allocation3 + $0xc] sm:$0xf]
        %v499 = vld [vmem:[#allocation3 + $0x10] sm:$0xf]
        %v500 = vld [vmem:[#allocation3 + $0x14] sm:$0xf]
        %v501 = vld [vmem:[#allocation3 + $0x18] sm:$0xf]
        %v502 = vld [vmem:[#allocation3 + $0x1c] sm:$0xf]
        %v503 = vld [vmem:[#allocation3 + $0x20] sm:$0xf]
        %v504 = vld [vmem:[#allocation3 + $0x24] sm:$0xf]
        %v505 = vld [vmem:[#allocation3 + $0x28] sm:$0xf]
        %v506 = vld [vmem:[#allocation3 + $0x2c] sm:$0xf]
        %v507 = vld [vmem:[#allocation3 + $0x30] sm:$0xf]
        %v508 = vld [vmem:[#allocation3 + $0x34] sm:$0xf]
        %v509 = vld [vmem:[#allocation3 + $0x38] sm:$0xf]
        %v510 = vld [vmem:[#allocation3 + $0x3c] sm:$0xf]
        %v511 = vld [vmem:[%s3] sm:$0xf]
        %v512 = vld [vmem:[%s3 + $0x4] sm:$0xf]
        %v513 = vld [vmem:[%s3 + $0x8] sm:$0xf]
        %v514 = vld [vmem:[%s3 + $0xc] sm:$0xf]
        %v515 = vld [vmem:[%s3 + $0x10] sm:$0xf]
        %v516 = vld [vmem:[%s3 + $0x14] sm:$0xf]
        %v517 = vld [vmem:[%s3 + $0x18] sm:$0xf]
        %v518 = vld [vmem:[%s3 + $0x1c] sm:$0xf]
        %v519 = vld [vmem:[%s3 + $0x20] sm:$0xf]
        %v520 = vld [vmem:[%s3 + $0x24] sm:$0xf]
        %v521 = vld [vmem:[%s3 + $0x28] sm:$0xf]
        %v522 = vld [vmem:[%s3 + $0x2c] sm:$0xf]
        %v523 = vld [vmem:[%s3 + $0x30] sm:$0xf]
        %v524 = vld [vmem:[%s3 + $0x34] sm:$0xf]
        %v525 = vld [vmem:[%s3 + $0x38] sm:$0xf]
        %v526 = vld [vmem:[%s3 + $0x3c] sm:$0xf]
        %v543 = vunpack.c.l.b16 %v495
        %v544 = vunpack.c.l.b16 %v496
        %v545 = vunpack.c.l.b16 %v497
        %v546 = vunpack.c.l.b16 %v498
        %v547 = vunpack.c.l.b16 %v499
        %v548 = vunpack.c.l.b16 %v500
        %v549 = vunpack.c.l.b16 %v501
        %v550 = vunpack.c.l.b16 %v502
        %v551 = vunpack.c.l.b16 %v503
        %v552 = vunpack.c.l.b16 %v504
        %v553 = vunpack.c.l.b16 %v505
        %v554 = vunpack.c.l.b16 %v506
        %v555 = vunpack.c.l.b16 %v507
        %v556 = vunpack.c.l.b16 %v508
        %v557 = vunpack.c.l.b16 %v509
        %v558 = vunpack.c.l.b16 %v510
        %v559 = vpack.c.b16 %v544, %v543
        %v560 = vpack.c.b16 %v546, %v545
        %v561 = vpack.c.b16 %v548, %v547
        %v562 = vpack.c.b16 %v550, %v549
        %v563 = vpack.c.b16 %v552, %v551
        %v564 = vpack.c.b16 %v554, %v553
        %v565 = vpack.c.b16 %v556, %v555
        %v566 = vpack.c.b16 %v558, %v557
        %v591 = vunpack.c.l.b16 %v511
        %v592 = vunpack.c.l.b16 %v512
        %v593 = vunpack.c.l.b16 %v513
        %v594 = vunpack.c.l.b16 %v514
        %v595 = vunpack.c.l.b16 %v515
        %v596 = vunpack.c.l.b16 %v516
        %v597 = vunpack.c.l.b16 %v517
        %v598 = vunpack.c.l.b16 %v518
        %v599 = vunpack.c.l.b16 %v519
        %v600 = vunpack.c.l.b16 %v520
        %v601 = vunpack.c.l.b16 %v521
        %v602 = vunpack.c.l.b16 %v522
        %v603 = vunpack.c.l.b16 %v523
        %v604 = vunpack.c.l.b16 %v524
        %v605 = vunpack.c.l.b16 %v525
        %v606 = vunpack.c.l.b16 %v526
        %v607 = vpack.c.b16 %v592, %v591
        %v608 = vpack.c.b16 %v594, %v593
        %v609 = vpack.c.b16 %v596, %v595
        %v610 = vpack.c.b16 %v598, %v597
        %v611 = vpack.c.b16 %v600, %v599
        %v612 = vpack.c.b16 %v602, %v601
        %v613 = vpack.c.b16 %v604, %v603
        %v614 = vpack.c.b16 %v606, %v605
        %623 = vmatpush.bf16.msra.mxu0 %v614
        %624 = vmatpush.bf16.msra.mxu0 %v613
        %625 = vmatpush.bf16.msra.mxu0 %v612
        %626 = vmatpush.bf16.msra.mxu0 %v611
        %627 = vmatpush.bf16.msra.mxu0 %v610
        %628 = vmatpush.bf16.msra.mxu0 %v609
        %629 = vmatpush.bf16.msra.mxu0 %v608
        %630 = vmatpush.bf16.msra.mxu0 %v607
        %631 = vmatmul.bf16.gmra.mxu0 %v559
        %v632 = vpop.f32.mrf.mxu0
        %v633 = vadd.f32 0.0, %v632
        %v634 = vpop.f32.mrf.mxu0
        %v635 = vadd.f32 0.0, %v634
        %636 = vmatmul.bf16.gmra.mxu0 %v560
        %v637 = vpop.f32.mrf.mxu0
        %v638 = vadd.f32 0.0, %v637
        %v639 = vpop.f32.mrf.mxu0
        %v640 = vadd.f32 0.0, %v639
        %641 = vmatmul.bf16.gmra.mxu0 %v561
        %v642 = vpop.f32.mrf.mxu0
        %v643 = vadd.f32 0.0, %v642
        %v644 = vpop.f32.mrf.mxu0
        %v645 = vadd.f32 0.0, %v644
        %646 = vmatmul.bf16.gmra.mxu0 %v562
        %v647 = vpop.f32.mrf.mxu0
        %v648 = vadd.f32 0.0, %v647
        %v649 = vpop.f32.mrf.mxu0
        %v650 = vadd.f32 0.0, %v649
        %651 = vmatmul.bf16.gmra.mxu0 %v563
        %v652 = vpop.f32.mrf.mxu0
        %v653 = vadd.f32 0.0, %v652
        %v654 = vpop.f32.mrf.mxu0
        %v655 = vadd.f32 0.0, %v654
        %656 = vmatmul.bf16.gmra.mxu0 %v564
        %v657 = vpop.f32.mrf.mxu0
        %v658 = vadd.f32 0.0, %v657
        %v659 = vpop.f32.mrf.mxu0
        %v660 = vadd.f32 0.0, %v659
        %661 = vmatmul.bf16.gmra.mxu0 %v565
        %v662 = vpop.f32.mrf.mxu0
        %v663 = vadd.f32 0.0, %v662
        %v664 = vpop.f32.mrf.mxu0
        %v665 = vadd.f32 0.0, %v664
        %666 = vmatmul.bf16.gmra.mxu0 %v566
        %v667 = vpop.f32.mrf.mxu0
        %v668 = vadd.f32 0.0, %v667
        %v669 = vpop.f32.mrf.mxu0
        %v670 = vadd.f32 0.0, %v669
        %671 = vdwg.mxu0
        %v672 = vpack.c.bf16 %v633, %v633
        %v673 = vpack.c.bf16 %v635, %v635
        %v674 = vpack.c.bf16 %v638, %v638
        %v675 = vpack.c.bf16 %v640, %v640
        %v676 = vpack.c.bf16 %v643, %v643
        %v677 = vpack.c.bf16 %v645, %v645
        %v678 = vpack.c.bf16 %v648, %v648
        %v679 = vpack.c.bf16 %v650, %v650
        %v680 = vpack.c.bf16 %v653, %v653
        %v681 = vpack.c.bf16 %v655, %v655
        %v682 = vpack.c.bf16 %v658, %v658
        %v683 = vpack.c.bf16 %v660, %v660
        %v684 = vpack.c.bf16 %v663, %v663
        %v685 = vpack.c.bf16 %v665, %v665
        %v686 = vpack.c.bf16 %v668, %v668
        %v687 = vpack.c.bf16 %v670, %v670
        %688 = vst [vmem:[#allocation2] sm:$0xf] %v672
        %689 = vst [vmem:[#allocation2 + $0x4] sm:$0xf] %v673
        %690 = vst [vmem:[#allocation2 + $0x8] sm:$0xf] %v674
        %691 = vst [vmem:[#allocation2 + $0xc] sm:$0xf] %v675
        %692 = vst [vmem:[#allocation2 + $0x10] sm:$0xf] %v676
        %693 = vst [vmem:[#allocation2 + $0x14] sm:$0xf] %v677
        %694 = vst [vmem:[#allocation2 + $0x18] sm:$0xf] %v678
        %695 = vst [vmem:[#allocation2 + $0x1c] sm:$0xf] %v679
        %696 = vst [vmem:[#allocation2 + $0x20] sm:$0xf] %v680
        %697 = vst [vmem:[#allocation2 + $0x24] sm:$0xf] %v681
        %698 = vst [vmem:[#allocation2 + $0x28] sm:$0xf] %v682
        %699 = vst [vmem:[#allocation2 + $0x2c] sm:$0xf] %v683
        %700 = vst [vmem:[#allocation2 + $0x30] sm:$0xf] %v684
        %701 = vst [vmem:[#allocation2 + $0x34] sm:$0xf] %v685
        %702 = vst [vmem:[#allocation2 + $0x38] sm:$0xf] %v686
        %703 = vst [vmem:[#allocation2 + $0x3c] sm:$0xf] %v687
      $region52: #{gin_convolution_lin.1} parent=43 // pred_fallthru
        _
      %v704 = vld [vmem:[%s262] sm:$0xf]
      %v705 = vld [vmem:[%s262 + $0x4] sm:$0xf]
      %v706 = vld [vmem:[%s262 + $0x8] sm:$0xf]
      %v707 = vld [vmem:[%s262 + $0xc] sm:$0xf]
      %v708 = vld [vmem:[%s262 + $0x10] sm:$0xf]
      %v709 = vld [vmem:[%s262 + $0x14] sm:$0xf]
      %v710 = vld [vmem:[%s262 + $0x18] sm:$0xf]
      %v711 = vld [vmem:[%s262 + $0x1c] sm:$0xf]
      %v712 = vld [vmem:[%s262 + $0x20] sm:$0xf]
      %v713 = vld [vmem:[%s262 + $0x24] sm:$0xf]
      %v714 = vld [vmem:[%s262 + $0x28] sm:$0xf]
      %v715 = vld [vmem:[%s262 + $0x2c] sm:$0xf]
      %v716 = vld [vmem:[%s262 + $0x30] sm:$0xf]
      %v717 = vld [vmem:[%s262 + $0x34] sm:$0xf]
      %v718 = vld [vmem:[%s262 + $0x38] sm:$0xf]
      %v719 = vld [vmem:[%s262 + $0x3c] sm:$0xf]
      %v720 = vld [vmem:[#allocation2] sm:$0xf]
      %v721 = vld [vmem:[#allocation2 + $0x4] sm:$0xf]
      %v722 = vld [vmem:[#allocation2 + $0x8] sm:$0xf]
      %v723 = vld [vmem:[#allocation2 + $0xc] sm:$0xf]
      %v724 = vld [vmem:[#allocation2 + $0x10] sm:$0xf]
      %v725 = vld [vmem:[#allocation2 + $0x14] sm:$0xf]
      %v726 = vld [vmem:[#allocation2 + $0x18] sm:$0xf]
      %v727 = vld [vmem:[#allocation2 + $0x1c] sm:$0xf]
      %v728 = vld [vmem:[#allocation2 + $0x20] sm:$0xf]
      %v729 = vld [vmem:[#allocation2 + $0x24] sm:$0xf]
      %v730 = vld [vmem:[#allocation2 + $0x28] sm:$0xf]
      %v731 = vld [vmem:[#allocation2 + $0x2c] sm:$0xf]
      %v732 = vld [vmem:[#allocation2 + $0x30] sm:$0xf]
      %v733 = vld [vmem:[#allocation2 + $0x34] sm:$0xf]
      %v734 = vld [vmem:[#allocation2 + $0x38] sm:$0xf]
      %v735 = vld [vmem:[#allocation2 + $0x3c] sm:$0xf]
      %v752 = vunpack.c.l.b16 %v704
      %v753 = vunpack.c.l.b16 %v705
      %v754 = vunpack.c.l.b16 %v706
      %v755 = vunpack.c.l.b16 %v707
      %v756 = vunpack.c.l.b16 %v708
      %v757 = vunpack.c.l.b16 %v709
      %v758 = vunpack.c.l.b16 %v710
      %v759 = vunpack.c.l.b16 %v711
      %v760 = vunpack.c.l.b16 %v712
      %v761 = vunpack.c.l.b16 %v713
      %v762 = vunpack.c.l.b16 %v714
      %v763 = vunpack.c.l.b16 %v715
      %v764 = vunpack.c.l.b16 %v716
      %v765 = vunpack.c.l.b16 %v717
      %v766 = vunpack.c.l.b16 %v718
      %v767 = vunpack.c.l.b16 %v719
      %v768 = vpack.c.b16 %v753, %v752
      %v769 = vpack.c.b16 %v755, %v754
      %v770 = vpack.c.b16 %v757, %v756
      %v771 = vpack.c.b16 %v759, %v758
      %v772 = vpack.c.b16 %v761, %v760
      %v773 = vpack.c.b16 %v763, %v762
      %v774 = vpack.c.b16 %v765, %v764
      %v775 = vpack.c.b16 %v767, %v766
      %v800 = vunpack.c.l.b16 %v720
      %v801 = vunpack.c.l.b16 %v721
      %v802 = vunpack.c.l.b16 %v722
      %v803 = vunpack.c.l.b16 %v723
      %v804 = vunpack.c.l.b16 %v724
      %v805 = vunpack.c.l.b16 %v725
      %v806 = vunpack.c.l.b16 %v726
      %v807 = vunpack.c.l.b16 %v727
      %v808 = vunpack.c.l.b16 %v728
      %v809 = vunpack.c.l.b16 %v729
      %v810 = vunpack.c.l.b16 %v730
      %v811 = vunpack.c.l.b16 %v731
      %v812 = vunpack.c.l.b16 %v732
      %v813 = vunpack.c.l.b16 %v733
      %v814 = vunpack.c.l.b16 %v734
      %v815 = vunpack.c.l.b16 %v735
      %v816 = vpack.c.b16 %v801, %v800
      %v817 = vpack.c.b16 %v803, %v802
      %v818 = vpack.c.b16 %v805, %v804
      %v819 = vpack.c.b16 %v807, %v806
      %v820 = vpack.c.b16 %v809, %v808
      %v821 = vpack.c.b16 %v811, %v810
      %v822 = vpack.c.b16 %v813, %v812
      %v823 = vpack.c.b16 %v815, %v814
      %832 = vmatpush.bf16.msra.mxu0 %v823
      %833 = vmatpush.bf16.msra.mxu0 %v822
      %834 = vmatpush.bf16.msra.mxu0 %v821
      %835 = vmatpush.bf16.msra.mxu0 %v820
      %836 = vmatpush.bf16.msra.mxu0 %v819
      %837 = vmatpush.bf16.msra.mxu0 %v818
      %838 = vmatpush.bf16.msra.mxu0 %v817
      %839 = vmatpush.bf16.msra.mxu0 %v816
      %840 = vmatmul.bf16.gmra.mxu0 %v768
      %v841 = vpop.f32.mrf.mxu0
      %v842 = vadd.f32 0.0, %v841
      %v843 = vpop.f32.mrf.mxu0
      %v844 = vadd.f32 0.0, %v843
      %845 = vmatmul.bf16.gmra.mxu0 %v769
      %v846 = vpop.f32.mrf.mxu0
      %v847 = vadd.f32 0.0, %v846
      %v848 = vpop.f32.mrf.mxu0
      %v849 = vadd.f32 0.0, %v848
      %850 = vmatmul.bf16.gmra.mxu0 %v770
      %v851 = vpop.f32.mrf.mxu0
      %v852 = vadd.f32 0.0, %v851
      %v853 = vpop.f32.mrf.mxu0
      %v854 = vadd.f32 0.0, %v853
      %855 = vmatmul.bf16.gmra.mxu0 %v771
      %v856 = vpop.f32.mrf.mxu0
      %v857 = vadd.f32 0.0, %v856
      %v858 = vpop.f32.mrf.mxu0
      %v859 = vadd.f32 0.0, %v858
      %860 = vmatmul.bf16.gmra.mxu0 %v772
      %v861 = vpop.f32.mrf.mxu0
      %v862 = vadd.f32 0.0, %v861
      %v863 = vpop.f32.mrf.mxu0
      %v864 = vadd.f32 0.0, %v863
      %865 = vmatmul.bf16.gmra.mxu0 %v773
      %v866 = vpop.f32.mrf.mxu0
      %v867 = vadd.f32 0.0, %v866
      %v868 = vpop.f32.mrf.mxu0
      %v869 = vadd.f32 0.0, %v868
      %870 = vmatmul.bf16.gmra.mxu0 %v774
      %v871 = vpop.f32.mrf.mxu0
      %v872 = vadd.f32 0.0, %v871
      %v873 = vpop.f32.mrf.mxu0
      %v874 = vadd.f32 0.0, %v873
      %875 = vmatmul.bf16.gmra.mxu0 %v775
      %v876 = vpop.f32.mrf.mxu0
      %v877 = vadd.f32 0.0, %v876
      %v878 = vpop.f32.mrf.mxu0
      %v879 = vadd.f32 0.0, %v878
      %880 = vdwg.mxu0
      // Predicated region
      $region53: #{gin_convolution_lin.1} parent=43 // pred_check
        %p881 = pneg %p275
      $region54: #{gin_convolution_lin.1} parent=43 // pred_check_branch
        %883 = sbr.rel (%p881) target = $region56
      $region55: #{gin_convolution_lin.1} parent=43 // pred_region
        %v884 = vperm.slane %v272, 0
        %v885 = vadd.f32 %v842, %v884
        %v886 = vadd.f32 %v844, %v884
        %v887 = vadd.f32 %v847, %v884
        %v888 = vadd.f32 %v849, %v884
        %v889 = vadd.f32 %v852, %v884
        %v890 = vadd.f32 %v854, %v884
        %v891 = vadd.f32 %v857, %v884
        %v892 = vadd.f32 %v859, %v884
        %v893 = vadd.f32 %v862, %v884
        %v894 = vadd.f32 %v864, %v884
        %v895 = vadd.f32 %v867, %v884
        %v896 = vadd.f32 %v869, %v884
        %v897 = vadd.f32 %v872, %v884
        %v898 = vadd.f32 %v874, %v884
        %v899 = vadd.f32 %v877, %v884
        %v900 = vadd.f32 %v879, %v884
        %v901 = vmax.f32 %v885, 0.0
        %v902 = vmax.f32 %v886, 0.0
        %v903 = vmax.f32 %v887, 0.0
        %v904 = vmax.f32 %v888, 0.0
        %v905 = vmax.f32 %v889, 0.0
        %v906 = vmax.f32 %v890, 0.0
        %v907 = vmax.f32 %v891, 0.0
        %v908 = vmax.f32 %v892, 0.0
        %v909 = vmax.f32 %v893, 0.0
        %v910 = vmax.f32 %v894, 0.0
        %v911 = vmax.f32 %v895, 0.0
        %v912 = vmax.f32 %v896, 0.0
        %v913 = vmax.f32 %v897, 0.0
        %v914 = vmax.f32 %v898, 0.0
        %v915 = vmax.f32 %v899, 0.0
        %v916 = vmax.f32 %v900, 0.0
        %s917 = smul.u32 %s22, 128
        %v918 = vpack.c.bf16 %v901, %v901
        %v919 = vpack.c.bf16 %v902, %v902
        %v920 = vpack.c.bf16 %v903, %v903
        %v921 = vpack.c.bf16 %v904, %v904
        %v922 = vpack.c.bf16 %v905, %v905
        %v923 = vpack.c.bf16 %v906, %v906
        %v924 = vpack.c.bf16 %v907, %v907
        %v925 = vpack.c.bf16 %v908, %v908
        %v926 = vpack.c.bf16 %v909, %v909
        %v927 = vpack.c.bf16 %v910, %v910
        %v928 = vpack.c.bf16 %v911, %v911
        %v929 = vpack.c.bf16 %v912, %v912
        %v930 = vpack.c.bf16 %v913, %v913
        %v931 = vpack.c.bf16 %v914, %v914
        %v932 = vpack.c.bf16 %v915, %v915
        %v933 = vpack.c.bf16 %v916, %v916
        %s934 = sshra.s32 %s917, 3
        %s935 = sand.u32 %s917, 7
        %s936 = smul.addr %s934, 4
        %s937 = scalar_lea.vmem [#allocation3], %s936
        %938 = vst [vmem:[%s937] sm:$0xf] %v918
        %939 = vst [vmem:[%s937 + $0x4] sm:$0xf] %v919
        %940 = vst [vmem:[%s937 + $0x8] sm:$0xf] %v920
        %941 = vst [vmem:[%s937 + $0xc] sm:$0xf] %v921
        %942 = vst [vmem:[%s937 + $0x10] sm:$0xf] %v922
        %943 = vst [vmem:[%s937 + $0x14] sm:$0xf] %v923
        %944 = vst [vmem:[%s937 + $0x18] sm:$0xf] %v924
        %945 = vst [vmem:[%s937 + $0x1c] sm:$0xf] %v925
        %946 = vst [vmem:[%s937 + $0x20] sm:$0xf] %v926
        %947 = vst [vmem:[%s937 + $0x24] sm:$0xf] %v927
        %948 = vst [vmem:[%s937 + $0x28] sm:$0xf] %v928
        %949 = vst [vmem:[%s937 + $0x2c] sm:$0xf] %v929
        %950 = vst [vmem:[%s937 + $0x30] sm:$0xf] %v930
        %951 = vst [vmem:[%s937 + $0x34] sm:$0xf] %v931
        %952 = vst [vmem:[%s937 + $0x38] sm:$0xf] %v932
        %953 = vst [vmem:[%s937 + $0x3c] sm:$0xf] %v933
      $region56: #{gin_convolution_lin.1} parent=43 // pred_fallthru
        _
      // Predicated region
      $region57: #{gin_convolution_lin.1} parent=43 // pred_check
        %p954 = pneg %p490
      $region58: #{gin_convolution_lin.1} parent=43 // pred_check_branch
        %956 = sbr.rel (%p954) target = $region60
      $region59: #{gin_convolution_lin.1} parent=43 // pred_region
        %v957 = vperm.slane %v273, 0
        %v958 = vadd.f32 %v842, %v957
        %v959 = vadd.f32 %v844, %v957
        %v960 = vadd.f32 %v847, %v957
        %v961 = vadd.f32 %v849, %v957
        %v962 = vadd.f32 %v852, %v957
        %v963 = vadd.f32 %v854, %v957
        %v964 = vadd.f32 %v857, %v957
        %v965 = vadd.f32 %v859, %v957
        %v966 = vadd.f32 %v862, %v957
        %v967 = vadd.f32 %v864, %v957
        %v968 = vadd.f32 %v867, %v957
        %v969 = vadd.f32 %v869, %v957
        %v970 = vadd.f32 %v872, %v957
        %v971 = vadd.f32 %v874, %v957
        %v972 = vadd.f32 %v877, %v957
        %v973 = vadd.f32 %v879, %v957
        %v974 = vpack.c.bf16 %v959, %v958
        %v975 = vpack.c.bf16 %v961, %v960
        %v976 = vpack.c.bf16 %v963, %v962
        %v977 = vpack.c.bf16 %v965, %v964
        %v978 = vpack.c.bf16 %v967, %v966
        %v979 = vpack.c.bf16 %v969, %v968
        %v980 = vpack.c.bf16 %v971, %v970
        %v981 = vpack.c.bf16 %v973, %v972
        %v982 = vld [vmem:[%s4] sm:$0xf]
        %v983 = vld [vmem:[%s4 + $0x4] sm:$0xf]
        %v984 = vld [vmem:[%s4 + $0x8] sm:$0xf]
        %v985 = vld [vmem:[%s4 + $0xc] sm:$0xf]
        %v986 = vld [vmem:[%s4 + $0x10] sm:$0xf]
        %v987 = vld [vmem:[%s4 + $0x14] sm:$0xf]
        %v988 = vld [vmem:[%s4 + $0x18] sm:$0xf]
        %v989 = vld [vmem:[%s4 + $0x1c] sm:$0xf]
        %v990 = vld [vmem:[%s4 + $0x20] sm:$0xf]
        %v991 = vld [vmem:[%s4 + $0x24] sm:$0xf]
        %v992 = vld [vmem:[%s4 + $0x28] sm:$0xf]
        %v993 = vld [vmem:[%s4 + $0x2c] sm:$0xf]
        %v994 = vld [vmem:[%s4 + $0x30] sm:$0xf]
        %v995 = vld [vmem:[%s4 + $0x34] sm:$0xf]
        %v996 = vld [vmem:[%s4 + $0x38] sm:$0xf]
        %v997 = vld [vmem:[%s4 + $0x3c] sm:$0xf]
        %v998 = vperm.slane %v274, 0
        %v1015 = vunpack.c.l.b16 %v982
        %v1016 = vunpack.c.l.b16 %v983
        %v1017 = vunpack.c.l.b16 %v984
        %v1018 = vunpack.c.l.b16 %v985
        %v1019 = vunpack.c.l.b16 %v986
        %v1020 = vunpack.c.l.b16 %v987
        %v1021 = vunpack.c.l.b16 %v988
        %v1022 = vunpack.c.l.b16 %v989
        %v1023 = vunpack.c.l.b16 %v990
        %v1024 = vunpack.c.l.b16 %v991
        %v1025 = vunpack.c.l.b16 %v992
        %v1026 = vunpack.c.l.b16 %v993
        %v1027 = vunpack.c.l.b16 %v994
        %v1028 = vunpack.c.l.b16 %v995
        %v1029 = vunpack.c.l.b16 %v996
        %v1030 = vunpack.c.l.b16 %v997
        %v1031 = vpack.c.b16 %v1016, %v1015
        %v1032 = vpack.c.b16 %v1018, %v1017
        %v1033 = vpack.c.b16 %v1020, %v1019
        %v1034 = vpack.c.b16 %v1022, %v1021
        %v1035 = vpack.c.b16 %v1024, %v1023
        %v1036 = vpack.c.b16 %v1026, %v1025
        %v1037 = vpack.c.b16 %v1028, %v1027
        %v1038 = vpack.c.b16 %v1030, %v1029
        %1047 = vmatpush.bf16.msra.mxu0 %v1038
        %1048 = vmatpush.bf16.msra.mxu0 %v1037
        %1049 = vmatpush.bf16.msra.mxu0 %v1036
        %1050 = vmatpush.bf16.msra.mxu0 %v1035
        %1051 = vmatpush.bf16.msra.mxu0 %v1034
        %1052 = vmatpush.bf16.msra.mxu0 %v1033
        %1053 = vmatpush.bf16.msra.mxu0 %v1032
        %1054 = vmatpush.bf16.msra.mxu0 %v1031
        %1055 = vmatmul.bf16.gmra.mxu0 %v974
        %v1056 = vpop.f32.mrf.mxu0
        %v1057 = vadd.f32 %v998, %v1056
        %v1058 = vpop.f32.mrf.mxu0
        %v1059 = vadd.f32 %v998, %v1058
        %1060 = vmatmul.bf16.gmra.mxu0 %v975
        %v1061 = vpop.f32.mrf.mxu0
        %v1062 = vadd.f32 %v998, %v1061
        %v1063 = vpop.f32.mrf.mxu0
        %v1064 = vadd.f32 %v998, %v1063
        %1065 = vmatmul.bf16.gmra.mxu0 %v976
        %v1066 = vpop.f32.mrf.mxu0
        %v1067 = vadd.f32 %v998, %v1066
        %v1068 = vpop.f32.mrf.mxu0
        %v1069 = vadd.f32 %v998, %v1068
        %1070 = vmatmul.bf16.gmra.mxu0 %v977
        %v1071 = vpop.f32.mrf.mxu0
        %v1072 = vadd.f32 %v998, %v1071
        %v1073 = vpop.f32.mrf.mxu0
        %v1074 = vadd.f32 %v998, %v1073
        %1075 = vmatmul.bf16.gmra.mxu0 %v978
        %v1076 = vpop.f32.mrf.mxu0
        %v1077 = vadd.f32 %v998, %v1076
        %v1078 = vpop.f32.mrf.mxu0
        %v1079 = vadd.f32 %v998, %v1078
        %1080 = vmatmul.bf16.gmra.mxu0 %v979
        %v1081 = vpop.f32.mrf.mxu0
        %v1082 = vadd.f32 %v998, %v1081
        %v1083 = vpop.f32.mrf.mxu0
        %v1084 = vadd.f32 %v998, %v1083
        %1085 = vmatmul.bf16.gmra.mxu0 %v980
        %v1086 = vpop.f32.mrf.mxu0
        %v1087 = vadd.f32 %v998, %v1086
        %v1088 = vpop.f32.mrf.mxu0
        %v1089 = vadd.f32 %v998, %v1088
        %1090 = vmatmul.bf16.gmra.mxu0 %v981
        %v1091 = vpop.f32.mrf.mxu0
        %v1092 = vadd.f32 %v998, %v1091
        %v1093 = vpop.f32.mrf.mxu0
        %v1094 = vadd.f32 %v998, %v1093
        %1095 = vdwg.mxu0
        %v1096 = vlaneseq
        %v1097 = vand.u32 %v1096, 127
        %vm1098 = vcmp.lt.s32.totalorder %v1097, 8
        %v1099 = vsel %vm1098, %v1057, -1e+30
        %v1100 = vsel %vm1098, %v1059, -1e+30
        %v1101 = vsel %vm1098, %v1062, -1e+30
        %v1102 = vsel %vm1098, %v1064, -1e+30
        %v1103 = vsel %vm1098, %v1067, -1e+30
        %v1104 = vsel %vm1098, %v1069, -1e+30
        %v1105 = vsel %vm1098, %v1072, -1e+30
        %v1106 = vsel %vm1098, %v1074, -1e+30
        %v1107 = vsel %vm1098, %v1077, -1e+30
        %v1108 = vsel %vm1098, %v1079, -1e+30
        %v1109 = vsel %vm1098, %v1082, -1e+30
        %v1110 = vsel %vm1098, %v1084, -1e+30
        %v1111 = vsel %vm1098, %v1087, -1e+30
        %v1112 = vsel %vm1098, %v1089, -1e+30
        %v1113 = vsel %vm1098, %v1092, -1e+30
        %v1114 = vsel %vm1098, %v1094, -1e+30
        %1115 = vmax.xlane.f32.xlu0 %v1099
        %v1116 = vpop.xlane.xlu0 %1115
        %1117 = vmax.xlane.f32.xlu0 %v1100
        %v1118 = vpop.xlane.xlu0 %1117
        %1119 = vmax.xlane.f32.xlu0 %v1101
        %v1120 = vpop.xlane.xlu0 %1119
        %1121 = vmax.xlane.f32.xlu0 %v1102
        %v1122 = vpop.xlane.xlu0 %1121
        %1123 = vmax.xlane.f32.xlu0 %v1103
        %v1124 = vpop.xlane.xlu0 %1123
        %1125 = vmax.xlane.f32.xlu0 %v1104
        %v1126 = vpop.xlane.xlu0 %1125
        %1127 = vmax.xlane.f32.xlu0 %v1105
        %v1128 = vpop.xlane.xlu0 %1127
        %1129 = vmax.xlane.f32.xlu0 %v1106
        %v1130 = vpop.xlane.xlu0 %1129
        %1131 = vmax.xlane.f32.xlu0 %v1107
        %v1132 = vpop.xlane.xlu0 %1131
        %1133 = vmax.xlane.f32.xlu0 %v1108
        %v1134 = vpop.xlane.xlu0 %1133
        %1135 = vmax.xlane.f32.xlu0 %v1109
        %v1136 = vpop.xlane.xlu0 %1135
        %1137 = vmax.xlane.f32.xlu0 %v1110
        %v1138 = vpop.xlane.xlu0 %1137
        %1139 = vmax.xlane.f32.xlu0 %v1111
        %v1140 = vpop.xlane.xlu0 %1139
        %1141 = vmax.xlane.f32.xlu0 %v1112
        %v1142 = vpop.xlane.xlu0 %1141
        %1143 = vmax.xlane.f32.xlu0 %v1113
        %v1144 = vpop.xlane.xlu0 %1143
        %1145 = vmax.xlane.f32.xlu0 %v1114
        %v1146 = vpop.xlane.xlu0 %1145
        %v1147 = vsub.f32 %v1099, %v1116
        %v1148 = vsub.f32 %v1100, %v1118
        %v1149 = vsub.f32 %v1101, %v1120
        %v1150 = vsub.f32 %v1102, %v1122
        %v1151 = vsub.f32 %v1103, %v1124
        %v1152 = vsub.f32 %v1104, %v1126
        %v1153 = vsub.f32 %v1105, %v1128
        %v1154 = vsub.f32 %v1106, %v1130
        %v1155 = vsub.f32 %v1107, %v1132
        %v1156 = vsub.f32 %v1108, %v1134
        %v1157 = vsub.f32 %v1109, %v1136
        %v1158 = vsub.f32 %v1110, %v1138
        %v1159 = vsub.f32 %v1111, %v1140
        %v1160 = vsub.f32 %v1112, %v1142
        %v1161 = vsub.f32 %v1113, %v1144
        %v1162 = vsub.f32 %v1114, %v1146
        %v1163 = vmul.f32 %v1147, 1.442695
        %v1164 = vpow.pop %v1163
        %v1165 = vmul.f32 %v1148, 1.442695
        %v1166 = vpow.pop %v1165
        %v1167 = vmul.f32 %v1149, 1.442695
        %v1168 = vpow.pop %v1167
        %v1169 = vmul.f32 %v1150, 1.442695
        %v1170 = vpow.pop %v1169
        %v1171 = vmul.f32 %v1151, 1.442695
        %v1172 = vpow.pop %v1171
        %v1173 = vmul.f32 %v1152, 1.442695
        %v1174 = vpow.pop %v1173
        %v1175 = vmul.f32 %v1153, 1.442695
        %v1176 = vpow.pop %v1175
        %v1177 = vmul.f32 %v1154, 1.442695
        %v1178 = vpow.pop %v1177
        %v1179 = vmul.f32 %v1155, 1.442695
        %v1180 = vpow.pop %v1179
        %v1181 = vmul.f32 %v1156, 1.442695
        %v1182 = vpow.pop %v1181
        %v1183 = vmul.f32 %v1157, 1.442695
        %v1184 = vpow.pop %v1183
        %v1185 = vmul.f32 %v1158, 1.442695
        %v1186 = vpow.pop %v1185
        %v1187 = vmul.f32 %v1159, 1.442695
        %v1188 = vpow.pop %v1187
        %v1189 = vmul.f32 %v1160, 1.442695
        %v1190 = vpow.pop %v1189
        %v1191 = vmul.f32 %v1161, 1.442695
        %v1192 = vpow.pop %v1191
        %v1193 = vmul.f32 %v1162, 1.442695
        %v1194 = vpow.pop %v1193
        %1195 = vadd.xlane.f32.xlu0 %v1164
        %v1196 = vpop.xlane.xlu0 %1195
        %1197 = vadd.xlane.f32.xlu0 %v1166
        %v1198 = vpop.xlane.xlu0 %1197
        %1199 = vadd.xlane.f32.xlu0 %v1168
        %v1200 = vpop.xlane.xlu0 %1199
        %1201 = vadd.xlane.f32.xlu0 %v1170
        %v1202 = vpop.xlane.xlu0 %1201
        %1203 = vadd.xlane.f32.xlu0 %v1172
        %v1204 = vpop.xlane.xlu0 %1203
        %1205 = vadd.xlane.f32.xlu0 %v1174
        %v1206 = vpop.xlane.xlu0 %1205
        %1207 = vadd.xlane.f32.xlu0 %v1176
        %v1208 = vpop.xlane.xlu0 %1207
        %1209 = vadd.xlane.f32.xlu0 %v1178
        %v1210 = vpop.xlane.xlu0 %1209
        %1211 = vadd.xlane.f32.xlu0 %v1180
        %v1212 = vpop.xlane.xlu0 %1211
        %1213 = vadd.xlane.f32.xlu0 %v1182
        %v1214 = vpop.xlane.xlu0 %1213
        %1215 = vadd.xlane.f32.xlu0 %v1184
        %v1216 = vpop.xlane.xlu0 %1215
        %1217 = vadd.xlane.f32.xlu0 %v1186
        %v1218 = vpop.xlane.xlu0 %1217
        %1219 = vadd.xlane.f32.xlu0 %v1188
        %v1220 = vpop.xlane.xlu0 %1219
        %1221 = vadd.xlane.f32.xlu0 %v1190
        %v1222 = vpop.xlane.xlu0 %1221
        %1223 = vadd.xlane.f32.xlu0 %v1192
        %v1224 = vpop.xlane.xlu0 %1223
        %1225 = vadd.xlane.f32.xlu0 %v1194
        %v1226 = vpop.xlane.xlu0 %1225
        %v1227 = vlog2.pop %v1196
        %v1228 = vmul.f32 %v1227, 0.6931472
        %v1229 = vlog2.pop %v1198
        %v1230 = vmul.f32 %v1229, 0.6931472
        %v1231 = vlog2.pop %v1200
        %v1232 = vmul.f32 %v1231, 0.6931472
        %v1233 = vlog2.pop %v1202
        %v1234 = vmul.f32 %v1233, 0.6931472
        %v1235 = vlog2.pop %v1204
        %v1236 = vmul.f32 %v1235, 0.6931472
        %v1237 = vlog2.pop %v1206
        %v1238 = vmul.f32 %v1237, 0.6931472
        %v1239 = vlog2.pop %v1208
        %v1240 = vmul.f32 %v1239, 0.6931472
        %v1241 = vlog2.pop %v1210
        %v1242 = vmul.f32 %v1241, 0.6931472
        %v1243 = vlog2.pop %v1212
        %v1244 = vmul.f32 %v1243, 0.6931472
        %v1245 = vlog2.pop %v1214
        %v1246 = vmul.f32 %v1245, 0.6931472
        %v1247 = vlog2.pop %v1216
        %v1248 = vmul.f32 %v1247, 0.6931472
        %v1249 = vlog2.pop %v1218
        %v1250 = vmul.f32 %v1249, 0.6931472
        %v1251 = vlog2.pop %v1220
        %v1252 = vmul.f32 %v1251, 0.6931472
        %v1253 = vlog2.pop %v1222
        %v1254 = vmul.f32 %v1253, 0.6931472
        %v1255 = vlog2.pop %v1224
        %v1256 = vmul.f32 %v1255, 0.6931472
        %v1257 = vlog2.pop %v1226
        %v1258 = vmul.f32 %v1257, 0.6931472
        %v1259 = vsub.f32 %v1147, %v1228
        %v1260 = vsub.f32 %v1148, %v1230
        %v1261 = vsub.f32 %v1149, %v1232
        %v1262 = vsub.f32 %v1150, %v1234
        %v1263 = vsub.f32 %v1151, %v1236
        %v1264 = vsub.f32 %v1152, %v1238
        %v1265 = vsub.f32 %v1153, %v1240
        %v1266 = vsub.f32 %v1154, %v1242
        %v1267 = vsub.f32 %v1155, %v1244
        %v1268 = vsub.f32 %v1156, %v1246
        %v1269 = vsub.f32 %v1157, %v1248
        %v1270 = vsub.f32 %v1158, %v1250
        %v1271 = vsub.f32 %v1159, %v1252
        %v1272 = vsub.f32 %v1160, %v1254
        %v1273 = vsub.f32 %v1161, %v1256
        %v1274 = vsub.f32 %v1162, %v1258
        %1275 = vst [vmem:[%s269] sm:$0xff] %v1259
        %1276 = vst [vmem:[%s269 + $0x8] sm:$0xff] %v1260
        %1277 = vst [vmem:[%s269 + $0x10] sm:$0xff] %v1261
        %1278 = vst [vmem:[%s269 + $0x18] sm:$0xff] %v1262
        %1279 = vst [vmem:[%s269 + $0x20] sm:$0xff] %v1263
        %1280 = vst [vmem:[%s269 + $0x28] sm:$0xff] %v1264
        %1281 = vst [vmem:[%s269 + $0x30] sm:$0xff] %v1265
        %1282 = vst [vmem:[%s269 + $0x38] sm:$0xff] %v1266
        %1283 = vst [vmem:[%s269 + $0x40] sm:$0xff] %v1267
        %1284 = vst [vmem:[%s269 + $0x48] sm:$0xff] %v1268
        %1285 = vst [vmem:[%s269 + $0x50] sm:$0xff] %v1269
        %1286 = vst [vmem:[%s269 + $0x58] sm:$0xff] %v1270
        %1287 = vst [vmem:[%s269 + $0x60] sm:$0xff] %v1271
        %1288 = vst [vmem:[%s269 + $0x68] sm:$0xff] %v1272
        %1289 = vst [vmem:[%s269 + $0x70] sm:$0xff] %v1273
        %1290 = vst [vmem:[%s269 + $0x78] sm:$0xff] %v1274
      $region60: #{gin_convolution_lin.1} parent=43 // pred_fallthru
        _
      %s1291 = smul.u32 %s22, %s21
      %s1292 = smul.u32 16, %s1291
      %p1293 = scmp.lt.s32.totalorder %s1292, 15
      %s1294 = scalar_select %p1293, %s1292, 15
      %s1295 = smul.addr %s1294, 8
      %s1296 = scalar_lea.vmem %s6, %s1295
      // Predicated region
      $region61: #{gin_convolution_lin.1} parent=43 // pred_check
        %p1297 = pneg %p180
      $region62: #{gin_convolution_lin.1} parent=43 // pred_check_branch
        %1299 = sbr.rel (%p1297) target = $region64
      $region63: #{gin_convolution_lin.1} parent=43 // pred_region
        %s1300 = smul.u32 %s22, %s21
        %s1301 = smul.u32 16, %s1300
      $region64: #{gin_convolution_lin.1} parent=43 // pred_fallthru
        _
    $region44: #{gin_convolution_lin.1} parent=5 // pred_fallthru
      _
    %p1302 = scmp.le.s32.totalorder 2, %s12
    // Predicated region
    $region65: #{gin_convolution_lin.1} parent=5 // pred_check
      %p1303 = pneg %p1302
    $region66: #{gin_convolution_lin.1} parent=5 // pred_check_branch
      %1305 = sbr.rel (%p1303) target = $region68
    $region67: #{gin_convolution_lin.1} parent=5 // pred_region
      %s1306 = ssub.s32 %s12, 2
      // Predicated region
      $region69: #{gin_convolution_lin.1} parent=67 // pred_check
        %p1307 = pneg %p186
      $region70: #{gin_convolution_lin.1} parent=67 // pred_check_branch
        %1309 = sbr.rel (%p1307) target = $region72
      $region71: #{gin_convolution_lin.1} parent=67 // pred_region
        %s1310 = smul.u32 %s24, %s23
        %s1311 = smul.u32 16, %s1310
        %p1312 = scmp.lt.s32.totalorder %s1311, 15
        %s1313 = scalar_select %p1312, %s1311, 15
        %s1314 = smul.addr %s1313, 8
        %s1315 = scalar_lea.vmem %s6, %s1314
      $region72: #{gin_convolution_lin.1} parent=67 // pred_fallthru
        _
    $region68: #{gin_convolution_lin.1} parent=5 // pred_fallthru
      _
  $region6: #{gin_convolution_lin.1} parent=0 // loop_footer
    %s16 = sadd.s32 1, %s12
  $region7: #{gin_convolution_lin.1} parent=0 // loop_footer_branch
    %11 = sbr.rel target = $region3
  $region8: #{gin_convolution_lin.1} parent=0 // loop_exit
    _

</llo_original>
